<compile_context>
chip_gen: v6e
topology: v6e:2x2x1
jax: 0.10.0
libtpu: 0.0.40
codegen_flags: <defaults>
</compile_context>

<pallas_src>
import functools

import jax
import jax.numpy as jnp
import numpy as np
from jax.experimental import pallas as pl
from jax.experimental.pallas import tpu as pltpu


def _mlp_attn_kernel(valid_len_ref,           # SMEM (B,) int32           (scalar prefetch)
                     q_ref,                   # VMEM (block_b, block_q, Dq)
                     key_ref,                 # VMEM (block_b, block_k, Dk)
                     val_ref,                 # VMEM (block_b, block_k, Dv)
                     wq_ref,                  # VMEM (Dq, U)
                     wkT_ref,                 # VMEM (U, Dk)
                     vv_ref,                  # VMEM (U, 1)
                     o_ref,                   # VMEM (block_b, block_q, Dv)
                     qp_sc,                   # VMEM (block_b, block_q, U)  elem_dtype
                     m_sc,                    # VMEM (block_b, block_q, 1)  f32 running max
                     l_sc,                    # VMEM (block_b, block_q, 1)  f32 running denom
                     acc_sc,                  # VMEM (block_b, block_q, Dv) f32 accumulator
                     *, block_b, block_k, k_total, mask_pad, elem_dtype, approx_recip):
    bi = pl.program_id(0)                     # batch-block index ("parallel")
    ki = pl.program_id(2)                     # key-tile index    ("arbitrary", reduction)
    block_q = q_ref.shape[1]

    @pl.when(ki == 0)
    def _init():
        # Query projection on the MXU, stored once per (bi, qi) K-sweep in
        # elem_dtype scratch (no per-key-tile casts in the hot loop).
        for b in range(block_b):
            qp_sc[b] = jnp.dot(q_ref[b], wq_ref[...],
                               preferred_element_type=jnp.float32).astype(qp_sc.dtype)
        m_sc[...] = jnp.full(m_sc.shape, -jnp.inf, jnp.float32)
        l_sc[...] = jnp.zeros(l_sc.shape, jnp.float32)
        acc_sc[...] = jnp.zeros(acc_sc.shape, jnp.float32)

    wkT = wkT_ref[...]                        # (U, Dk)
    vv_col = vv_ref[...].astype(elem_dtype)   # (U, 1)

    # Hoisted out of the batch unroll (JAX does not CSE broadcast_in_dim):
    # global key indices of this tile + pad mask for the K-padding region.
    kidx = ki * block_k + jax.lax.broadcasted_iota(jnp.int32, (block_q, block_k), 1)
    pad_mask = (kidx < k_total).astype(jnp.float32) if mask_pad else None

    # Small static unroll over the batch block (block_b <= 2 by default).
    for b in range(block_b):
        # Key projection with K landing on the lane axis:
        #   kpT[u, k] = sum_d wkT[u, d] * key[k, d]        (A @ B^T contraction)
        # -> no wrapper-side HBM transpose of `key`, no materialized in-kernel
        #    transpose; the O(Q*U*K) tanh/add stream below uses packed vregs.
        kpT = jax.lax.dot_general(
            wkT, key_ref[b], (((1,), (1,)), ((), ())),
            preferred_element_type=jnp.float32).astype(elem_dtype)      # (U, block_k)
        qp_b = qp_sc[b]                                                  # (block_q, U)

        # Additive-attention features, layout (Q, U, K): K on lanes.
        feat = jnp.tanh(qp_b[:, :, None] + kpT[None, :, :])
        # v-contraction over U (VPU mul + sublane reduce); accumulate in f32.
        scores = jnp.sum((feat * vv_col[None, :, :]).astype(jnp.float32), axis=1)

        # masked_softmax (d2l semantics): positions k >= valid_len get -1e6.
        vl = valid_len_ref[bi * block_b + b]
        scores = jnp.where(kidx < vl, scores, jnp.float32(-1e6))

        # Online (flash-style) softmax across key tiles; stats kept in f32.
        m_prev = m_sc[b]
        m_new = jnp.maximum(m_prev, jnp.max(scores, axis=-1, keepdims=True))
        alpha = jnp.exp(m_prev - m_new)
        p = jnp.exp(scores - m_new)
        if mask_pad:
            # Padded key columns (k >= K) must contribute nothing, even when
            # valid_len == 0 turns every *real* score into -1e6 (otherwise the
            # denominator would be K_pad instead of K).
            p = p * pad_mask
        l_sc[b] = alpha * l_sc[b] + jnp.sum(p, axis=-1, keepdims=True)
        acc_sc[b] = alpha * acc_sc[b] + jnp.dot(
            p.astype(val_ref.dtype), val_ref[b], preferred_element_type=jnp.float32)
        m_sc[b] = m_new

    @pl.when(ki == pl.num_programs(2) - 1)
    def _finalize():
        # dropout(p=0) at inference is the identity.
        # TODO(synk): non-zero dropout (training mode) not implemented.
        inv_l = pl.reciprocal(l_sc[...], approx=approx_recip)
        o_ref[...] = (acc_sc[...] * inv_l).astype(o_ref.dtype)


# ----------------------------- wrapper / tiling ---------------------------------

def _device_kind():
    try:
        return jax.devices()[0].device_kind.lower()
    except Exception:
        return ""


def _auto_defaults(elem_dtype, block_k, vmem_limit_bytes):
    kind = _device_kind()
    is_v5 = "v5" in kind
    is_v6 = "v6" in kind
    is_v7 = ("v7" in kind) or ("7x" in kind)
    if elem_dtype is None:
        # bf16 tanh/add stream on chips with bf16 VPU/EUP paths; f32 elsewhere
        # (v5e has no bf16 VPU/EUP, bf16 would only add converts).
        elem_dtype = jnp.bfloat16 if (is_v6 or is_v7) else jnp.float32
    if block_k is None:
        block_k = 128 if is_v7 else 256       # halve key tiles on v7x (64 MiB VMEM)
    if vmem_limit_bytes is None:
        if is_v7:
            vmem_limit_bytes = 48 << 20       # leave headroom under 64 MiB physical
        elif is_v6:
            vmem_limit_bytes = 96 << 20
        elif is_v5:
            vmem_limit_bytes = 64 << 20       # scoped default is only 16 MiB on v5e
        # unknown chip: keep the compiler default (None)
    return elem_dtype, block_k, vmem_limit_bytes


def _pick_block_b(batch, cap=2):
    """Largest divisor of `batch` <= cap that still leaves >= 2 batch grid steps
    (so both v7x TensorCores get work) whenever batch >= 2."""
    best = 1
    for d in range(1, min(batch, cap) + 1):
        if batch % d == 0 and (batch // d >= 2 or batch == 1):
            best = d
    return best


def _pick_block_q(q_len, block_q):
    """Q tile: whole Q when small, otherwise a sublane-aligned divisor <= block_q."""
    if block_q is None:
        block_q = 256                      # multiples of 256: full MXU passes on v6e
    if q_len <= block_q:
        return q_len
    if q_len % block_q == 0 and block_q % 8 == 0:
        return block_q
    best = q_len                           # fall back to whole Q if nothing divides
    for d in range(8, block_q + 1, 8):
        if q_len % d == 0:
            best = d
    return best


def mlp_attention(query, key, value, valid_len, wq, wk, v_row, *,
                  block_k=None, block_q=None, block_b=None,
                  elem_dtype=None,          # None -> bf16 on v6e/v7x, f32 on v5e
                  approx_recip=False,       # True -> EUP vrcp for the softmax denom
                  vmem_limit_bytes=None,    # None -> per-chip default
                  core_parallel_batch=False):  # shard batch axis across TCs explicitly
    B, Q, Dq = query.shape
    _, K, Dk = key.shape
    _, _, Dv = value.shape
    U = wq.shape[1]

    elem_dtype, block_k, vmem_limit_bytes = _auto_defaults(
        elem_dtype, block_k, vmem_limit_bytes)

    # ---- key-axis tiling (flash-style online softmax over key tiles) -----------
    if K <= block_k:
        block_k = K                          # single key tile, no padding needed
    else:
        block_k = max(8, (block_k // 8) * 8)  # sublane-aligned key tiles
    K_pad = pl.cdiv(K, block_k) * block_k
    mask_pad = K_pad != K
    if mask_pad:                             # only pay the pad pass when needed
        key = jnp.pad(key, ((0, 0), (0, K_pad - K), (0, 0)))
        value = jnp.pad(value, ((0, 0), (0, K_pad - K), (0, 0)))

    # ---- query tiling: bounds the (block_q, U, block_k) tanh working set -------
    block_q = _pick_block_q(Q, block_q)
    n_q_blocks = Q // block_q

    # ---- batch blocking (only useful when there is no Q-axis parallelism) ------
    if block_b is None:
        block_b = 1 if n_q_blocks > 1 else _pick_block_b(B)
    if B % block_b != 0:
        block_b = _pick_block_b(B)

    wkT = wk.T                               # (U, Dk): tiny wrapper transpose of a weight
    v_col = v_row.reshape(U, 1)              # (U, 1)
    vlen = valid_len.astype(jnp.int32)

    grid = (B // block_b, n_q_blocks, K_pad // block_k)
    batch_sem = pltpu.CORE_PARALLEL if core_parallel_batch else "parallel"

    kernel = functools.partial(
        _mlp_attn_kernel, block_b=block_b, block_k=block_k, k_total=K,
        mask_pad=mask_pad, elem_dtype=elem_dtype, approx_recip=approx_recip)

    out = pl.pallas_call(
        kernel,
        out_shape=jax.ShapeDtypeStruct((B, Q, Dv), jnp.float32),
        grid_spec=pltpu.PrefetchScalarGridSpec(
            num_scalar_prefetch=1,
            grid=grid,
            in_specs=[
                pl.BlockSpec((block_b, block_q, Dq), lambda bi, qi, ki, vl: (bi, qi, 0)),
                pl.BlockSpec((block_b, block_k, Dk), lambda bi, qi, ki, vl: (bi, ki, 0)),
                pl.BlockSpec((block_b, block_k, Dv), lambda bi, qi, ki, vl: (bi, ki, 0)),
                pl.BlockSpec((Dq, U),                lambda bi, qi, ki, vl: (0, 0)),
                pl.BlockSpec((U, Dk),                lambda bi, qi, ki, vl: (0, 0)),
                pl.BlockSpec((U, 1),                 lambda bi, qi, ki, vl: (0, 0)),
            ],
            out_specs=pl.BlockSpec((block_b, block_q, Dv),
                                   lambda bi, qi, ki, vl: (bi, qi, 0)),
            scratch_shapes=[
                pltpu.VMEM((block_b, block_q, U), elem_dtype),     # qp (elem_dtype)
                pltpu.VMEM((block_b, block_q, 1), jnp.float32),    # m
                pltpu.VMEM((block_b, block_q, 1), jnp.float32),    # l
                pltpu.VMEM((block_b, block_q, Dv), jnp.float32),   # acc
            ],
        ),
        compiler_params=pltpu.CompilerParams(
            dimension_semantics=(batch_sem, "parallel", "arbitrary"),
            vmem_limit_bytes=vmem_limit_bytes,
        ),
    )(vlen, query, key, value, wq, wkT, v_col)

    return out


# ----------------------------- pure-JAX reference --------------------------------

def reference(query, key, value, valid_len, wq, wk, v_row):
    qp = jnp.einsum('bqd,du->bqu', query, wq)
    kp = jnp.einsum('bkd,du->bku', key, wk)
    feat = jnp.tanh(qp[:, :, None, :] + kp[:, None, :, :])
    scores = jnp.einsum('bqku,u->bqk', feat, v_row[0])
    kidx = jnp.arange(key.shape[1])[None, None, :]
    scores = jnp.where(kidx < valid_len[:, None, None], scores, -1e6)
    attn = jax.nn.softmax(scores, axis=-1)
    return jnp.einsum('bqk,bkd->bqd', attn, value)


if __name__ == "__main__":
    # Small shapes consistent with the module's forward signature.
    B, Q, K = 2, 8, 8              # batch, num queries, num keys
    query_size, key_size = 16, 16  # input feature dims
    units = 32                     # hidden units of the MLP scorer
    Dv = 16                        # value feature dim

    root = jax.random.PRNGKey(0)
    kq, kk, kv, kwq, kwk, kvv = jax.random.split(root, 6)

    query = jax.random.normal(kq, (B, Q, query_size), dtype=jnp.float32)
    key   = jax.random.normal(kk, (B, K, key_size),   dtype=jnp.float32)
    value = jax.random.normal(kv, (B, K, Dv),         dtype=jnp.float32)
    valid_len = jnp.array([3, 6], dtype=jnp.int32)    # per-batch valid key length

    # Deterministic parameter init (nn.Linear default: U(-1/sqrt(fan_in), ...)),
    # stored pre-transposed as (in_features, out_features).
    bq = 1.0 / np.sqrt(query_size)
    bk = 1.0 / np.sqrt(key_size)
    bv = 1.0 / np.sqrt(units)
    wq    = jax.random.uniform(kwq, (query_size, units), jnp.float32, -bq, bq)
    wk    = jax.random.uniform(kwk, (key_size, units),   jnp.float32, -bk, bk)
    v_row = jax.random.uniform(kvv, (1, units),          jnp.float32, -bv, bv)

    ref = reference(query, key, value, valid_len, wq, wk, v_row)

    # 1) f32 element path: tight parity with the f32 reference.
    out = mlp_attention(query, key, value, valid_len, wq, wk, v_row,
                        elem_dtype=jnp.float32)
    out = jax.block_until_ready(out)
    np.testing.assert_allclose(np.asarray(out), np.asarray(ref), rtol=1e-5, atol=1e-5)

    # 2) Key-tiled path with K % block_k != 0 and a valid_len == 0 row
    #    (exercises the online softmax across key tiles and the pad-mask fix).
    K2 = 12
    kk2, kv2 = jax.random.split(jax.random.PRNGKey(1))
    key2   = jax.random.normal(kk2, (B, K2, key_size), dtype=jnp.float32)
    value2 = jax.random.normal(kv2, (B, K2, Dv),       dtype=jnp.float32)
    vlen2  = jnp.array([0, 7], dtype=jnp.int32)
    out2 = mlp_attention(query, key2, value2, vlen2, wq, wk, v_row,
                         elem_dtype=jnp.float32, block_k=8)
    out2 = jax.block_until_ready(out2)
    ref2 = reference(query, key2, value2, vlen2, wq, wk, v_row)
    np.testing.assert_allclose(np.asarray(out2), np.asarray(ref2), rtol=1e-5, atol=1e-5)

    # 3) Q-tiled path (Q > block_q) in f32.
    Q3 = 16
    query3 = jax.random.normal(jax.random.PRNGKey(2), (B, Q3, query_size), jnp.float32)
    out3 = mlp_attention(query3, key, value, valid_len, wq, wk, v_row,
                         elem_dtype=jnp.float32, block_q=8)
    out3 = jax.block_until_ready(out3)
    ref3 = reference(query3, key, value, valid_len, wq, wk, v_row)
    np.testing.assert_allclose(np.asarray(out3), np.asarray(ref3), rtol=1e-5, atol=1e-5)

    # 4) Device-default element path (bf16 tanh/add stream on v6e/v7x): sanity
    #    check only — bf16 rounding cannot meet 1e-5 parity by construction.
    out4 = mlp_attention(query, key, value, valid_len, wq, wk, v_row)
    out4 = jax.block_until_ready(out4)
    np.testing.assert_allclose(np.asarray(out4), np.asarray(ref), rtol=1e-1, atol=1e-1)

    print("KERNEL_OK")
</pallas_src>

<mosaic_0001>
module attributes {stable_mosaic.version = 11 : i64} {
  func.func @_mlp_attn_kernel(%arg0: i32, %arg1: i32, %arg2: i32, %arg3: memref<2xi32, #tpu.memory_space<smem>>, %arg4: memref<1x8x16xf32, #tpu.memory_space<vmem>>, %arg5: memref<1x8x16xf32, #tpu.memory_space<vmem>>, %arg6: memref<1x8x16xf32, #tpu.memory_space<vmem>>, %arg7: memref<16x32xf32, #tpu.memory_space<vmem>>, %arg8: memref<32x16xf32, #tpu.memory_space<vmem>>, %arg9: memref<32x1xf32, #tpu.memory_space<vmem>>, %arg10: memref<1x8x16xf32, #tpu.memory_space<vmem>>, %arg11: memref<1x8x32xf32, #tpu.memory_space<vmem>>, %arg12: memref<1x8x1xf32, #tpu.memory_space<vmem>>, %arg13: memref<1x8x1xf32, #tpu.memory_space<vmem>>, %arg14: memref<1x8x16xf32, #tpu.memory_space<vmem>>) attributes {dimension_semantics = [#tpu.dimension_semantics<parallel>, #tpu.dimension_semantics<parallel>, #tpu.dimension_semantics<arbitrary>], iteration_bounds = array<i64: 2, 1, 1>, scalar_prefetch = 1 : i64, scratch_operands = 4 : i64, tpu.core_type = #tpu.core_type<tc>, window_params = [{transform_indices = @transform_0, window_bounds = array<i64: 1, 8, 16>}, {transform_indices = @transform_1, window_bounds = array<i64: 1, 8, 16>}, {transform_indices = @transform_2, window_bounds = array<i64: 1, 8, 16>}, {pipeline_mode = #tpu.pipeline_mode<synchronous>, transform_indices = @transform_3, window_bounds = array<i64: 16, 32>}, {pipeline_mode = #tpu.pipeline_mode<synchronous>, transform_indices = @transform_4, window_bounds = array<i64: 32, 16>}, {pipeline_mode = #tpu.pipeline_mode<synchronous>, transform_indices = @transform_5, window_bounds = array<i64: 32, 1>}, {transform_indices = @transform_6, window_bounds = array<i64: 1, 8, 16>}]} {
    %c0_i32 = arith.constant 0 : i32
    %0 = arith.cmpi eq, %arg2, %c0_i32 : i32
    %1 = arith.extui %0 : i1 to i32
    %c0_i32_0 = arith.constant 0 : i32
    %2 = arith.cmpi ne, %1, %c0_i32_0 : i32
    scf.if %2 {
      %c0_39 = arith.constant 0 : index
      %c0_40 = arith.constant 0 : index
      %c0_41 = arith.constant 0 : index
      %68 = vector.load %arg4[%c0_39, %c0_40, %c0_41] : memref<1x8x16xf32, #tpu.memory_space<vmem>>, vector<1x8x16xf32>
      %69 = vector.shape_cast %68 : vector<1x8x16xf32> to vector<8x16xf32>
      %c0_42 = arith.constant 0 : index
      %c0_43 = arith.constant 0 : index
      %70 = vector.load %arg7[%c0_42, %c0_43] : memref<16x32xf32, #tpu.memory_space<vmem>>, vector<16x32xf32>
      %cst_44 = arith.constant dense<0.000000e+00> : vector<8x32xf32>
      %71 = tpu.matmul %69, %70, %cst_44 {dimension_numbers = #tpu.dot_dimension_numbers<[1], [0], [0], [1], [0, 0, 1, 1], [], []>} : vector<8x16xf32>, vector<16x32xf32>, vector<8x32xf32> -> vector<8x32xf32>
      %c0_45 = arith.constant 0 : index
      %c0_46 = arith.constant 0 : index
      %c0_47 = arith.constant 0 : index
      %72 = vector.load %arg11[%c0_45, %c0_46, %c0_47] : memref<1x8x32xf32, #tpu.memory_space<vmem>>, vector<1x8x32xf32>
      %73 = vector.shape_cast %72 : vector<1x8x32xf32> to vector<8x32xf32>
      %74 = vector.shape_cast %71 : vector<8x32xf32> to vector<1x8x32xf32>
      tpu.vector_store %arg11[%c0_45, %c0_46, %c0_47], %74 {strides = array<i32>} : memref<1x8x32xf32, #tpu.memory_space<vmem>>, vector<1x8x32xf32>,
      %cst_48 = arith.constant 0xFF800000 : f32
      %75 = vector.broadcast %cst_48 : f32 to vector<1x8x1xf32>
      %c0_49 = arith.constant 0 : index
      %c0_50 = arith.constant 0 : index
      %c0_51 = arith.constant 0 : index
      %76 = vector.load %arg12[%c0_49, %c0_50, %c0_51] : memref<1x8x1xf32, #tpu.memory_space<vmem>>, vector<1x8x1xf32>
      tpu.vector_store %arg12[%c0_49, %c0_50, %c0_51], %75 {strides = array<i32>} : memref<1x8x1xf32, #tpu.memory_space<vmem>>, vector<1x8x1xf32>,
      %cst_52 = arith.constant 0.000000e+00 : f32
      %77 = vector.broadcast %cst_52 : f32 to vector<1x8x1xf32>
      %c0_53 = arith.constant 0 : index
      %c0_54 = arith.constant 0 : index
      %c0_55 = arith.constant 0 : index
      %78 = vector.load %arg13[%c0_53, %c0_54, %c0_55] : memref<1x8x1xf32, #tpu.memory_space<vmem>>, vector<1x8x1xf32>
      tpu.vector_store %arg13[%c0_53, %c0_54, %c0_55], %77 {strides = array<i32>} : memref<1x8x1xf32, #tpu.memory_space<vmem>>, vector<1x8x1xf32>,
      %cst_56 = arith.constant 0.000000e+00 : f32
      %79 = vector.broadcast %cst_56 : f32 to vector<1x8x16xf32>
      %c0_57 = arith.constant 0 : index
      %c0_58 = arith.constant 0 : index
      %c0_59 = arith.constant 0 : index
      %80 = vector.load %arg14[%c0_57, %c0_58, %c0_59] : memref<1x8x16xf32, #tpu.memory_space<vmem>>, vector<1x8x16xf32>
      tpu.vector_store %arg14[%c0_57, %c0_58, %c0_59], %79 {strides = array<i32>} : memref<1x8x16xf32, #tpu.memory_space<vmem>>, vector<1x8x16xf32>,
    } else {
    }
    %c0 = arith.constant 0 : index
    %c0_1 = arith.constant 0 : index
    %3 = vector.load %arg8[%c0, %c0_1] : memref<32x16xf32, #tpu.memory_space<vmem>>, vector<32x16xf32>
    %c0_2 = arith.constant 0 : index
    %c0_3 = arith.constant 0 : index
    %4 = vector.load %arg9[%c0_2, %c0_3] : memref<32x1xf32, #tpu.memory_space<vmem>>, vector<32x1xf32>
    %c8_i32 = arith.constant 8 : i32
    %5 = arith.muli %arg2, %c8_i32 : i32
    %6 = tpu.iota {dimensions = array<i32: 1>} : vector<8x8xi32>
    %7 = vector.broadcast %5 : i32 to vector<8x8xi32>
    %8 = arith.addi %7, %6 : vector<8x8xi32>
    %c0_4 = arith.constant 0 : index
    %c0_5 = arith.constant 0 : index
    %c0_6 = arith.constant 0 : index
    %9 = vector.load %arg5[%c0_4, %c0_5, %c0_6] : memref<1x8x16xf32, #tpu.memory_space<vmem>>, vector<1x8x16xf32>
    %10 = vector.shape_cast %9 : vector<1x8x16xf32> to vector<8x16xf32>
    %cst = arith.constant dense<0.000000e+00> : vector<32x8xf32>
    %11 = tpu.matmul %3, %10, %cst {dimension_numbers = #tpu.dot_dimension_numbers<[1], [1], [0], [0], [0, 0, 1, 0], [], []>} : vector<32x16xf32>, vector<8x16xf32>, vector<32x8xf32> -> vector<32x8xf32>
    %c0_7 = arith.constant 0 : index
    %c0_8 = arith.constant 0 : index
    %c0_9 = arith.constant 0 : index
    %12 = vector.load %arg11[%c0_7, %c0_8, %c0_9] : memref<1x8x32xf32, #tpu.memory_space<vmem>>, vector<1x8x32xf32>
    %13 = vector.shape_cast %12 : vector<1x8x32xf32> to vector<8x32xf32>
    %14 = vector.shape_cast %13 : vector<8x32xf32> to vector<8x32x1xf32>
    %15 = vector.shape_cast %11 : vector<32x8xf32> to vector<1x32x8xf32>
    %16 = vector.broadcast %14 : vector<8x32x1xf32> to vector<8x32x8xf32>
    %17 = vector.broadcast %15 : vector<1x32x8xf32> to vector<8x32x8xf32>
    %18 = arith.addf %16, %17 : vector<8x32x8xf32>
    %19 = math.tanh %18 : vector<8x32x8xf32>
    %20 = vector.shape_cast %4 : vector<32x1xf32> to vector<1x32x1xf32>
    %21 = vector.broadcast %20 : vector<1x32x1xf32> to vector<8x32x8xf32>
    %22 = arith.mulf %19, %21 : vector<8x32x8xf32>
    %cst_10 = arith.constant dense<0.000000e+00> : vector<8x8xf32>
    %23 = vector.multi_reduction <add>, %22, %cst_10 [1] : vector<8x32x8xf32> to vector<8x8xf32>
    %c1_i32 = arith.constant 1 : i32
    %24 = arith.muli %arg0, %c1_i32 : i32
    %c0_i32_11 = arith.constant 0 : i32
    %25 = arith.addi %24, %c0_i32_11 : i32
    %26 = arith.index_cast %25 : i32 to index
    %27 = memref.load %arg3[%26] : memref<2xi32, #tpu.memory_space<smem>>
    %28 = vector.broadcast %27 : i32 to vector<8x8xi32>
    %29 = arith.cmpi slt, %8, %28 : vector<8x8xi32>
    %cst_12 = arith.constant -1.000000e+06 : f32
    %30 = vector.broadcast %cst_12 : f32 to vector<8x8xf32>
    %31 = arith.select %29, %23, %30 : vector<8x8xi1>, vector<8x8xf32>
    %c0_13 = arith.constant 0 : index
    %c0_14 = arith.constant 0 : index
    %c0_15 = arith.constant 0 : index
    %32 = vector.load %arg12[%c0_13, %c0_14, %c0_15] : memref<1x8x1xf32, #tpu.memory_space<vmem>>, vector<1x8x1xf32>
    %33 = vector.shape_cast %32 : vector<1x8x1xf32> to vector<8x1xf32>
    %cst_16 = arith.constant dense<0xFF800000> : vector<8xf32>
    %34 = vector.multi_reduction <maximumf>, %31, %cst_16 [1] : vector<8x8xf32> to vector<8xf32>
    %35 = vector.shape_cast %34 : vector<8xf32> to vector<8x1xf32>
    %36 = arith.maximumf %33, %35 : vector<8x1xf32>
    %37 = arith.subf %33, %36 : vector<8x1xf32>
    %38 = math.exp %37 : vector<8x1xf32>
    %39 = vector.broadcast %36 : vector<8x1xf32> to vector<8x8xf32>
    %40 = arith.subf %31, %39 : vector<8x8xf32>
    %41 = math.exp %40 : vector<8x8xf32>
    %c0_17 = arith.constant 0 : index
    %c0_18 = arith.constant 0 : index
    %c0_19 = arith.constant 0 : index
    %42 = vector.load %arg13[%c0_17, %c0_18, %c0_19] : memref<1x8x1xf32, #tpu.memory_space<vmem>>, vector<1x8x1xf32>
    %43 = vector.shape_cast %42 : vector<1x8x1xf32> to vector<8x1xf32>
    %44 = arith.mulf %38, %43 : vector<8x1xf32>
    %cst_20 = arith.constant dense<0.000000e+00> : vector<8xf32>
    %45 = vector.multi_reduction <add>, %41, %cst_20 [1] : vector<8x8xf32> to vector<8xf32>
    %46 = vector.shape_cast %45 : vector<8xf32> to vector<8x1xf32>
    %47 = arith.addf %44, %46 : vector<8x1xf32>
    %c0_21 = arith.constant 0 : index
    %c0_22 = arith.constant 0 : index
    %c0_23 = arith.constant 0 : index
    %48 = vector.load %arg13[%c0_21, %c0_22, %c0_23] : memref<1x8x1xf32, #tpu.memory_space<vmem>>, vector<1x8x1xf32>
    %49 = vector.shape_cast %48 : vector<1x8x1xf32> to vector<8x1xf32>
    %50 = vector.shape_cast %47 : vector<8x1xf32> to vector<1x8x1xf32>
    tpu.vector_store %arg13[%c0_21, %c0_22, %c0_23], %50 {strides = array<i32>} : memref<1x8x1xf32, #tpu.memory_space<vmem>>, vector<1x8x1xf32>,
    %c0_24 = arith.constant 0 : index
    %c0_25 = arith.constant 0 : index
    %c0_26 = arith.constant 0 : index
    %51 = vector.load %arg14[%c0_24, %c0_25, %c0_26] : memref<1x8x16xf32, #tpu.memory_space<vmem>>, vector<1x8x16xf32>
    %52 = vector.shape_cast %51 : vector<1x8x16xf32> to vector<8x16xf32>
    %53 = vector.broadcast %38 : vector<8x1xf32> to vector<8x16xf32>
    %54 = arith.mulf %53, %52 : vector<8x16xf32>
    %c0_27 = arith.constant 0 : index
    %c0_28 = arith.constant 0 : index
    %c0_29 = arith.constant 0 : index
    %55 = vector.load %arg6[%c0_27, %c0_28, %c0_29] : memref<1x8x16xf32, #tpu.memory_space<vmem>>, vector<1x8x16xf32>
    %56 = vector.shape_cast %55 : vector<1x8x16xf32> to vector<8x16xf32>
    %cst_30 = arith.constant dense<0.000000e+00> : vector<8x16xf32>
    %57 = tpu.matmul %41, %56, %cst_30 {dimension_numbers = #tpu.dot_dimension_numbers<[1], [0], [0], [1], [0, 0, 1, 1], [], []>} : vector<8x8xf32>, vector<8x16xf32>, vector<8x16xf32> -> vector<8x16xf32>
    %58 = arith.addf %54, %57 : vector<8x16xf32>
    %c0_31 = arith.constant 0 : index
    %c0_32 = arith.constant 0 : index
    %c0_33 = arith.constant 0 : index
    %59 = vector.load %arg14[%c0_31, %c0_32, %c0_33] : memref<1x8x16xf32, #tpu.memory_space<vmem>>, vector<1x8x16xf32>
    %60 = vector.shape_cast %59 : vector<1x8x16xf32> to vector<8x16xf32>
    %61 = vector.shape_cast %58 : vector<8x16xf32> to vector<1x8x16xf32>
    tpu.vector_store %arg14[%c0_31, %c0_32, %c0_33], %61 {strides = array<i32>} : memref<1x8x16xf32, #tpu.memory_space<vmem>>, vector<1x8x16xf32>,
    %c0_34 = arith.constant 0 : index
    %c0_35 = arith.constant 0 : index
    %c0_36 = arith.constant 0 : index
    %62 = vector.load %arg12[%c0_34, %c0_35, %c0_36] : memref<1x8x1xf32, #tpu.memory_space<vmem>>, vector<1x8x1xf32>
    %63 = vector.shape_cast %62 : vector<1x8x1xf32> to vector<8x1xf32>
    %64 = vector.shape_cast %36 : vector<8x1xf32> to vector<1x8x1xf32>
    tpu.vector_store %arg12[%c0_34, %c0_35, %c0_36], %64 {strides = array<i32>} : memref<1x8x1xf32, #tpu.memory_space<vmem>>, vector<1x8x1xf32>,
    %c0_i32_37 = arith.constant 0 : i32
    %65 = arith.cmpi eq, %arg2, %c0_i32_37 : i32
    %66 = arith.extui %65 : i1 to i32
    %c0_i32_38 = arith.constant 0 : i32
    %67 = arith.cmpi ne, %66, %c0_i32_38 : i32
    scf.if %67 {
      %c0_39 = arith.constant 0 : index
      %c0_40 = arith.constant 0 : index
      %c0_41 = arith.constant 0 : index
      %68 = vector.load %arg13[%c0_39, %c0_40, %c0_41] : memref<1x8x1xf32, #tpu.memory_space<vmem>>, vector<1x8x1xf32>
      %69 = tpu.reciprocal %68 : vector<1x8x1xf32> -> vector<1x8x1xf32>
      %c0_42 = arith.constant 0 : index
      %c0_43 = arith.constant 0 : index
      %c0_44 = arith.constant 0 : index
      %70 = vector.load %arg14[%c0_42, %c0_43, %c0_44] : memref<1x8x16xf32, #tpu.memory_space<vmem>>, vector<1x8x16xf32>
      %71 = vector.broadcast %69 : vector<1x8x1xf32> to vector<1x8x16xf32>
      %72 = arith.mulf %70, %71 : vector<1x8x16xf32>
      %c0_45 = arith.constant 0 : index
      %c0_46 = arith.constant 0 : index
      %c0_47 = arith.constant 0 : index
      %73 = vector.load %arg10[%c0_45, %c0_46, %c0_47] : memref<1x8x16xf32, #tpu.memory_space<vmem>>, vector<1x8x16xf32>
      tpu.vector_store %arg10[%c0_45, %c0_46, %c0_47], %72 {strides = array<i32>} : memref<1x8x16xf32, #tpu.memory_space<vmem>>, vector<1x8x16xf32>,
    } else {
    }
    return
  }
  func.func @transform_0(%arg0: i32, %arg1: i32, %arg2: i32, %arg3: memref<2xi32, #tpu.memory_space<smem>>) -> (i32, i32, i32) {
    %c0_i32 = arith.constant 0 : i32
    %c0_i32_0 = arith.constant 0 : i32
    return %arg0, %arg1, %c0_i32 : i32, i32, i32
  }
  func.func @transform_1(%arg0: i32, %arg1: i32, %arg2: i32, %arg3: memref<2xi32, #tpu.memory_space<smem>>) -> (i32, i32, i32) {
    %c0_i32 = arith.constant 0 : i32
    %c0_i32_0 = arith.constant 0 : i32
    return %arg0, %arg2, %c0_i32 : i32, i32, i32
  }
  func.func @transform_2(%arg0: i32, %arg1: i32, %arg2: i32, %arg3: memref<2xi32, #tpu.memory_space<smem>>) -> (i32, i32, i32) {
    %c0_i32 = arith.constant 0 : i32
    %c0_i32_0 = arith.constant 0 : i32
    return %arg0, %arg2, %c0_i32 : i32, i32, i32
  }
  func.func @transform_3(%arg0: i32, %arg1: i32, %arg2: i32, %arg3: memref<2xi32, #tpu.memory_space<smem>>) -> (i32, i32) {
    %c0_i32 = arith.constant 0 : i32
    %c0_i32_0 = arith.constant 0 : i32
    %c0_i32_1 = arith.constant 0 : i32
    return %c0_i32, %c0_i32_0 : i32, i32
  }
  func.func @transform_4(%arg0: i32, %arg1: i32, %arg2: i32, %arg3: memref<2xi32, #tpu.memory_space<smem>>) -> (i32, i32) {
    %c0_i32 = arith.constant 0 : i32
    %c0_i32_0 = arith.constant 0 : i32
    %c0_i32_1 = arith.constant 0 : i32
    return %c0_i32, %c0_i32_0 : i32, i32
  }
  func.func @transform_5(%arg0: i32, %arg1: i32, %arg2: i32, %arg3: memref<2xi32, #tpu.memory_space<smem>>) -> (i32, i32) {
    %c0_i32 = arith.constant 0 : i32
    %c0_i32_0 = arith.constant 0 : i32
    %c0_i32_1 = arith.constant 0 : i32
    return %c0_i32, %c0_i32_0 : i32, i32
  }
  func.func @transform_6(%arg0: i32, %arg1: i32, %arg2: i32, %arg3: memref<2xi32, #tpu.memory_space<smem>>) -> (i32, i32, i32) {
    %c0_i32 = arith.constant 0 : i32
    %c0_i32_0 = arith.constant 0 : i32
    return %arg0, %arg1, %c0_i32 : i32, i32, i32
  }
}

</mosaic_0001>

<llo_original>
// kernel: tpu_custom_call.1
$region0: #{tpu_custom_call.1}
  #allocation0 [shape = 'u32[]', space=smem, size = 0x4, offset = 0x4, fixed_abs, tag = 'smem constant byte address 0x4 - core index']
  #allocation1 [shape = 'u32[144,128]{1,0:T(1,128)}', space=vmem, size = 0x12000, scoped, tag = 'internal scratch']
  #allocation2 [shape = 'f32[1,8,32]{2,1,0:T(8,128)}', space=vmem, size = 0x1000, scoped, tag = 'scratch operand']
  #allocation3 [shape = 'f32[1,8,1]{2,1,0:T(8,128)}', space=vmem, size = 0x1000, scoped, tag = 'scratch operand']
  #allocation4 [shape = 'f32[1,8,1]{2,1,0:T(8,128)}', space=vmem, size = 0x1000, scoped, tag = 'scratch operand']
  #allocation5 [shape = 'f32[1,8,16]{2,1,0:T(8,128)}', space=vmem, size = 0x1000, scoped, tag = 'scratch operand']
  #allocation6 [shape = 's32[1]{0}', space=sflag, size = 0x4, scoped, tag = 'scoped memory for tpu_custom_call.1']
  #allocation7 [shape = 'u8[512]{0}', space=smem, size = 0x200, scoped, tag = 'prefetched SMEM operand 0']
  %s0 = inlined_call_operand.vmem [shape: s32[2], index: 0, kind: input, shape index: {}]
  %s1 = inlined_call_operand.vmem [shape: f32[2,8,16], index: 1, kind: input, shape index: {}]
  %s2 = inlined_call_operand.vmem [shape: f32[2,8,16], index: 2, kind: input, shape index: {}]
  %s3 = inlined_call_operand.vmem [shape: f32[2,8,16], index: 3, kind: input, shape index: {}]
  %s4 = inlined_call_operand.vmem [shape: f32[16,32], index: 4, kind: input, shape index: {}]
  %s5 = inlined_call_operand.vmem [shape: f32[32,16], index: 5, kind: input, shape index: {}]
  %s6 = inlined_call_operand.vmem [shape: f32[32,1], index: 6, kind: input, shape index: {}]
  %s7 = inlined_call_operand.hbm [shape: f32[2,8,16], index: 7, kind: output, shape index: {}]
  %s8 = sld [smem:[#allocation0]]
  $region65: #{tpu_custom_call.1} parent=0
    _
  %s10 = ssub.s32 1, %s8
  %s11 = scalar_select 0, %s10, %s8
  %s12 = sshll.u32 %s0, 4
  %s13 = int_to_ptr.vmem [resolvable:$true] %s12
  %15 = dma.vmem_to_smem %s13, 16, [#allocation7], [#allocation6]
  %16 = dma.done [#allocation6], 16
  %17 = sfence
  $region1: #{tpu_custom_call.1} parent=0
    #allocation8 [shape = 'u8[8192]{0}', space=vmem, size = 0x2000, scoped, tag = 'output window, operand 0']
    #allocation9 [shape = 's32[2]{0}', space=sflag, size = 0x8, scoped, tag = 'scoped memory for tpu_custom_call.1']
    %18 = vsyncpa [#allocation9], 0
    %s19 = scalar_lea.sflag [#allocation9], 1
    %20 = vsyncpa %s19, 0
    loop: start=0, step=1, limit=4
    $region2: #{tpu_custom_call.1} parent=1 // loop_pre_header
      _
    $region3: #{tpu_custom_call.1} parent=1 // loop_header
      %s22 = sphi 0, %s26
      %p23 = scmp.ge.s32.totalorder %s22, 4
      %s29 = sphi 0, %s48
      %s30 = sphi 0, %s44
      %s31 = sphi 0, %s40
      %s32 = sphi 0, %s29
      %s33 = sphi 0, %s30
      %s34 = sphi 0, %s31
      %s35 = sphi 0, %s32
      %s36 = sphi 0, %s33
      %s37 = sphi 0, %s34
      %s53 = sphi 0, %s55
      %s56 = sphi 0, %s53
      %s57 = sphi 0, %s56
      %s73 = sphi 0, %s57
      %s81 = sphi 0, %s83
      %s84 = sphi 0, %s81
      %s85 = sphi 0, %s84
      %s101 = sphi 0, %s85
      %s109 = sphi 0, %s111
      %s112 = sphi 0, %s109
      %s113 = sphi 0, %s112
      %s129 = sphi 0, %s113
      %s133 = sphi 0, %s133
      %s135 = sphi 0, %s133
      %s136 = sphi 0, %s135
      %s150 = sphi 0, %s136
      %s154 = sphi 0, %s154
      %s156 = sphi 0, %s154
      %s157 = sphi 0, %s156
      %s171 = sphi 0, %s157
      %s175 = sphi 0, %s175
      %s177 = sphi 0, %s175
      %s178 = sphi 0, %s177
      %s192 = sphi 0, %s178
      %s200 = sphi 0, %s202
      %s203 = sphi 0, %s200
      %s204 = sphi 0, %s203
      %s220 = sphi 0, %s204
    $region4: #{tpu_custom_call.1} parent=1 // loop_header_branch
      %25 = sbr.rel (%p23) target = $region8
    $region5: #{tpu_custom_call.1} parent=1 // loop_body
      %s27 = ssub.s32 %s22, 1
      %s28 = ssub.s32 %s22, 2
      %s38 = sadd.s32 1, %s31
      %p39 = scmp.ge.s32.totalorder %s38, 1
      %s40 = scalar_select %p39, 0, %s38
      %s41 = sadd.s32 1, %s30
      %s42 = scalar_select %p39, %s41, %s30
      %p43 = scmp.ge.s32.totalorder %s42, 1
      %s44 = scalar_select %p43, 0, %s42
      %s45 = sadd.s32 1, %s29
      %s46 = scalar_select %p43, %s45, %s29
      %p47 = scmp.ge.s32.totalorder %s46, 2
      %s48 = scalar_select %p47, 0, %s46
      %s49 = ssub.s32 %s29, %s48
      %s50 = ssub.s32 %s30, %s44
      %s51 = sor.u32 %s49, %s50
      %p52 = scmp.eq.s32.totalorder %s51, 0
      %s54 = sadd.s32 %s53, 1
      %s55 = scalar_select %p52, %s53, %s54
      %p58 = pneg %p52
      %p59 = scmp.eq.s32.totalorder %s22, 1
      %p60 = por %p58, %p59
      %p61 = scmp.ne.s32.totalorder %s53, %s56
      %p62 = scmp.eq.s32.totalorder %s22, 0
      %p63 = por %p61, %p62
      %p64 = scmp.ne.s32.totalorder %s53, %s56
      %p65 = scmp.eq.s32.totalorder %s27, 1
      %p66 = por %p64, %p65
      %p67 = scmp.ne.s32.totalorder %s56, %s57
      %p68 = scmp.eq.s32.totalorder %s27, 0
      %p69 = por %p67, %p68
      %p70 = scmp.ne.s32.totalorder %s56, %s57
      %p71 = scmp.eq.s32.totalorder %s28, 1
      %p72 = por %p70, %p71
      %p74 = scmp.ne.s32.totalorder %s57, %s73
      %p75 = scmp.eq.s32.totalorder %s28, 0
      %p76 = por %p74, %p75
      %s77 = ssub.s32 %s29, %s48
      %s78 = ssub.s32 %s31, %s40
      %s79 = sor.u32 %s77, %s78
      %p80 = scmp.eq.s32.totalorder %s79, 0
      %s82 = sadd.s32 %s81, 1
      %s83 = scalar_select %p80, %s81, %s82
      %p86 = pneg %p80
      %p87 = scmp.eq.s32.totalorder %s22, 1
      %p88 = por %p86, %p87
      %p89 = scmp.ne.s32.totalorder %s81, %s84
      %p90 = scmp.eq.s32.totalorder %s22, 0
      %p91 = por %p89, %p90
      %p92 = scmp.ne.s32.totalorder %s81, %s84
      %p93 = scmp.eq.s32.totalorder %s27, 1
      %p94 = por %p92, %p93
      %p95 = scmp.ne.s32.totalorder %s84, %s85
      %p96 = scmp.eq.s32.totalorder %s27, 0
      %p97 = por %p95, %p96
      %p98 = scmp.ne.s32.totalorder %s84, %s85
      %p99 = scmp.eq.s32.totalorder %s28, 1
      %p100 = por %p98, %p99
      %p102 = scmp.ne.s32.totalorder %s85, %s101
      %p103 = scmp.eq.s32.totalorder %s28, 0
      %p104 = por %p102, %p103
      %s105 = ssub.s32 %s29, %s48
      %s106 = ssub.s32 %s31, %s40
      %s107 = sor.u32 %s105, %s106
      %p108 = scmp.eq.s32.totalorder %s107, 0
      %s110 = sadd.s32 %s109, 1
      %s111 = scalar_select %p108, %s109, %s110
      %p114 = pneg %p108
      %p115 = scmp.eq.s32.totalorder %s22, 1
      %p116 = por %p114, %p115
      %p117 = scmp.ne.s32.totalorder %s109, %s112
      %p118 = scmp.eq.s32.totalorder %s22, 0
      %p119 = por %p117, %p118
      %p120 = scmp.ne.s32.totalorder %s109, %s112
      %p121 = scmp.eq.s32.totalorder %s27, 1
      %p122 = por %p120, %p121
      %p123 = scmp.ne.s32.totalorder %s112, %s113
      %p124 = scmp.eq.s32.totalorder %s27, 0
      %p125 = por %p123, %p124
      %p126 = scmp.ne.s32.totalorder %s112, %s113
      %p127 = scmp.eq.s32.totalorder %s28, 1
      %p128 = por %p126, %p127
      %p130 = scmp.ne.s32.totalorder %s113, %s129
      %p131 = scmp.eq.s32.totalorder %s28, 0
      %p132 = por %p130, %p131
      %s134 = sadd.s32 %s133, 1
      %p137 = scmp.eq.s32.totalorder %s22, 1
      %p138 = scmp.ne.s32.totalorder %s133, %s135
      %p139 = scmp.eq.s32.totalorder %s22, 0
      %p140 = por %p138, %p139
      %p141 = scmp.ne.s32.totalorder %s133, %s135
      %p142 = scmp.eq.s32.totalorder %s27, 1
      %p143 = por %p141, %p142
      %p144 = scmp.ne.s32.totalorder %s135, %s136
      %p145 = scmp.eq.s32.totalorder %s27, 0
      %p146 = por %p144, %p145
      %p147 = scmp.ne.s32.totalorder %s135, %s136
      %p148 = scmp.eq.s32.totalorder %s28, 1
      %p149 = por %p147, %p148
      %p151 = scmp.ne.s32.totalorder %s136, %s150
      %p152 = scmp.eq.s32.totalorder %s28, 0
      %p153 = por %p151, %p152
      %s155 = sadd.s32 %s154, 1
      %p158 = scmp.eq.s32.totalorder %s22, 1
      %p159 = scmp.ne.s32.totalorder %s154, %s156
      %p160 = scmp.eq.s32.totalorder %s22, 0
      %p161 = por %p159, %p160
      %p162 = scmp.ne.s32.totalorder %s154, %s156
      %p163 = scmp.eq.s32.totalorder %s27, 1
      %p164 = por %p162, %p163
      %p165 = scmp.ne.s32.totalorder %s156, %s157
      %p166 = scmp.eq.s32.totalorder %s27, 0
      %p167 = por %p165, %p166
      %p168 = scmp.ne.s32.totalorder %s156, %s157
      %p169 = scmp.eq.s32.totalorder %s28, 1
      %p170 = por %p168, %p169
      %p172 = scmp.ne.s32.totalorder %s157, %s171
      %p173 = scmp.eq.s32.totalorder %s28, 0
      %p174 = por %p172, %p173
      %s176 = sadd.s32 %s175, 1
      %p179 = scmp.eq.s32.totalorder %s22, 1
      %p180 = scmp.ne.s32.totalorder %s175, %s177
      %p181 = scmp.eq.s32.totalorder %s22, 0
      %p182 = por %p180, %p181
      %p183 = scmp.ne.s32.totalorder %s175, %s177
      %p184 = scmp.eq.s32.totalorder %s27, 1
      %p185 = por %p183, %p184
      %p186 = scmp.ne.s32.totalorder %s177, %s178
      %p187 = scmp.eq.s32.totalorder %s27, 0
      %p188 = por %p186, %p187
      %p189 = scmp.ne.s32.totalorder %s177, %s178
      %p190 = scmp.eq.s32.totalorder %s28, 1
      %p191 = por %p189, %p190
      %p193 = scmp.ne.s32.totalorder %s178, %s192
      %p194 = scmp.eq.s32.totalorder %s28, 0
      %p195 = por %p193, %p194
      %s196 = ssub.s32 %s29, %s48
      %s197 = ssub.s32 %s30, %s44
      %s198 = sor.u32 %s196, %s197
      %p199 = scmp.eq.s32.totalorder %s198, 0
      %s201 = sadd.s32 %s200, 1
      %s202 = scalar_select %p199, %s200, %s201
      %p205 = pneg %p199
      %p206 = scmp.eq.s32.totalorder %s22, 1
      %p207 = por %p205, %p206
      %p208 = scmp.ne.s32.totalorder %s200, %s203
      %p209 = scmp.eq.s32.totalorder %s22, 0
      %p210 = por %p208, %p209
      %p211 = scmp.ne.s32.totalorder %s200, %s203
      %p212 = scmp.eq.s32.totalorder %s27, 1
      %p213 = por %p211, %p212
      %p214 = scmp.ne.s32.totalorder %s203, %s204
      %p215 = scmp.eq.s32.totalorder %s27, 0
      %p216 = por %p214, %p215
      %p217 = scmp.ne.s32.totalorder %s203, %s204
      %p218 = scmp.eq.s32.totalorder %s28, 1
      %p219 = por %p217, %p218
      %p221 = scmp.ne.s32.totalorder %s204, %s220
      %p222 = scmp.eq.s32.totalorder %s28, 0
      %p223 = por %p221, %p222
      %p224 = scmp.le.s32.totalorder 1, %s22
      %p225 = scmp.lt.s32.totalorder %s22, 3
      %p226 = pnand %p224, %p225
      %p227 = pneg %p226
      // Predicated region
      $region9: #{tpu_custom_call.1} parent=5 // pred_check
        _
      $region10: #{tpu_custom_call.1} parent=5 // pred_check_branch
        %229 = sbr.rel (%p226) target = $region12
      $region11: #{tpu_custom_call.1} parent=5 // pred_region
        %s230 = ssub.s32 %s22, 1
        // Predicated region
        $region13: #{tpu_custom_call.1} parent=11 // pred_check
          %p231 = pneg %p146
        $region14: #{tpu_custom_call.1} parent=11 // pred_check_branch
          %233 = sbr.rel (%p231) target = $region16
        $region15: #{tpu_custom_call.1} parent=11 // pred_region
          _
        $region16: #{tpu_custom_call.1} parent=11 // pred_fallthru
          _
        // Predicated region
        $region17: #{tpu_custom_call.1} parent=11 // pred_check
          %p234 = pneg %p167
        $region18: #{tpu_custom_call.1} parent=11 // pred_check_branch
          %236 = sbr.rel (%p234) target = $region20
        $region19: #{tpu_custom_call.1} parent=11 // pred_region
          _
        $region20: #{tpu_custom_call.1} parent=11 // pred_fallthru
          _
        // Predicated region
        $region21: #{tpu_custom_call.1} parent=11 // pred_check
          %p237 = pneg %p188
        $region22: #{tpu_custom_call.1} parent=11 // pred_check_branch
          %239 = sbr.rel (%p237) target = $region24
        $region23: #{tpu_custom_call.1} parent=11 // pred_region
          _
        $region24: #{tpu_custom_call.1} parent=11 // pred_fallthru
          _
      $region12: #{tpu_custom_call.1} parent=5 // pred_fallthru
        _
      %p240 = scmp.lt.s32.totalorder %s22, 2
      // Predicated region
      $region25: #{tpu_custom_call.1} parent=5 // pred_check
        %p241 = pneg %p240
      $region26: #{tpu_custom_call.1} parent=5 // pred_check_branch
        %243 = sbr.rel (%p241) target = $region28
      $region27: #{tpu_custom_call.1} parent=5 // pred_region
        // Predicated region
        $region29: #{tpu_custom_call.1} parent=27 // pred_check
          %p244 = pneg %p63
        $region30: #{tpu_custom_call.1} parent=27 // pred_check_branch
          %246 = sbr.rel (%p244) target = $region32
        $region31: #{tpu_custom_call.1} parent=27 // pred_region
          %p247 = scmp.lt.s32.totalorder %s29, 1
          %s248 = scalar_select %p247, %s29, 1
          %p249 = scmp.lt.s32.totalorder %s30, 0
          %s250 = scalar_select %p249, %s30, 0
          %s251 = sadd.s32 %s250, %s248
          %s252 = smul.addr %s251, 8
          %s253 = scalar_lea.vmem %s1, %s252
        $region32: #{tpu_custom_call.1} parent=27 // pred_fallthru
          _
        // Predicated region
        $region33: #{tpu_custom_call.1} parent=27 // pred_check
          %p254 = pneg %p91
        $region34: #{tpu_custom_call.1} parent=27 // pred_check_branch
          %256 = sbr.rel (%p254) target = $region36
        $region35: #{tpu_custom_call.1} parent=27 // pred_region
          %p257 = scmp.lt.s32.totalorder %s29, 1
          %s258 = scalar_select %p257, %s29, 1
          %p259 = scmp.lt.s32.totalorder %s31, 0
          %s260 = scalar_select %p259, %s31, 0
          %s261 = sadd.s32 %s260, %s258
          %s262 = smul.addr %s261, 8
          %s263 = scalar_lea.vmem %s2, %s262
        $region36: #{tpu_custom_call.1} parent=27 // pred_fallthru
          _
        // Predicated region
        $region37: #{tpu_custom_call.1} parent=27 // pred_check
          %p264 = pneg %p119
        $region38: #{tpu_custom_call.1} parent=27 // pred_check_branch
          %266 = sbr.rel (%p264) target = $region40
        $region39: #{tpu_custom_call.1} parent=27 // pred_region
          %p267 = scmp.lt.s32.totalorder %s29, 1
          %s268 = scalar_select %p267, %s29, 1
          %p269 = scmp.lt.s32.totalorder %s31, 0
          %s270 = scalar_select %p269, %s31, 0
          %s271 = sadd.s32 %s270, %s268
          %s272 = smul.addr %s271, 8
          %s273 = scalar_lea.vmem %s3, %s272
        $region40: #{tpu_custom_call.1} parent=27 // pred_fallthru
          _
      $region28: #{tpu_custom_call.1} parent=5 // pred_fallthru
        _
      %p274 = scmp.le.s32.totalorder 1, %s22
      %p275 = scmp.lt.s32.totalorder %s22, 3
      %p276 = pnand %p274, %p275
      %p277 = pneg %p276
      // Predicated region
      $region41: #{tpu_custom_call.1} parent=5 // pred_check
        _
      $region42: #{tpu_custom_call.1} parent=5 // pred_check_branch
        %279 = sbr.rel (%p276) target = $region44
      $region43: #{tpu_custom_call.1} parent=5 // pred_region
        %s280 = ssub.s32 %s22, 1
        %p281 = scmp.lt.s32.totalorder %s32, 1
        %s282 = scalar_select %p281, %s32, 1
        %p283 = scmp.lt.s32.totalorder %s33, 0
        %s284 = scalar_select %p283, %s33, 0
        %s285 = sadd.s32 %s284, %s282
        %s286 = smul.addr %s285, 8
        %s287 = scalar_lea.vmem %s1, %s286
        %p288 = pneg %p69
        %p289 = pneg %p66
        %p290 = scmp.lt.s32.totalorder %s32, 1
        %s291 = scalar_select %p290, %s32, 1
        %p292 = scmp.lt.s32.totalorder %s34, 0
        %s293 = scalar_select %p292, %s34, 0
        %s294 = sadd.s32 %s293, %s291
        %s295 = smul.addr %s294, 8
        %s296 = scalar_lea.vmem %s2, %s295
        %p297 = pneg %p97
        %p298 = pneg %p94
        %p299 = scmp.lt.s32.totalorder %s32, 1
        %s300 = scalar_select %p299, %s32, 1
        %p301 = scmp.lt.s32.totalorder %s34, 0
        %s302 = scalar_select %p301, %s34, 0
        %s303 = sadd.s32 %s302, %s300
        %s304 = smul.addr %s303, 8
        %s305 = scalar_lea.vmem %s3, %s304
        %p306 = pneg %p125
        %p307 = pneg %p122
        %p308 = pneg %p146
        %p309 = pneg %p143
        %p310 = pneg %p167
        %p311 = pneg %p164
        %p312 = pneg %p188
        %p313 = pneg %p185
        %p314 = pneg %p216
        %p315 = pneg %p213
        %s316 = sand.u32 %s203, 1
        %s317 = scalar_lea.sflag [#allocation9], %s316
        %s318 = sand.u32 %s203, 1
        %s319 = smul.addr %s318, 8
        %s320 = scalar_lea.vmem [#allocation8], %s319
        %p321 = scmp.lt.s32.totalorder %s32, 1
        %s322 = scalar_select %p321, %s32, 1
        %p323 = scmp.lt.s32.totalorder %s33, 0
        %s324 = scalar_select %p323, %s33, 0
        %s325 = sadd.s32 %s324, %s322
        %s326 = smul.addr %s325, 8
        %s327 = scalar_lea.vmem %s1, %s326
        %p328 = scmp.lt.s32.totalorder %s32, 1
        %s329 = scalar_select %p328, %s32, 1
        %p330 = scmp.lt.s32.totalorder %s34, 0
        %s331 = scalar_select %p330, %s34, 0
        %s332 = sadd.s32 %s331, %s329
        %s333 = smul.addr %s332, 8
        %s334 = scalar_lea.vmem %s2, %s333
        %p335 = scmp.lt.s32.totalorder %s32, 1
        %s336 = scalar_select %p335, %s32, 1
        %p337 = scmp.lt.s32.totalorder %s34, 0
        %s338 = scalar_select %p337, %s34, 0
        %s339 = sadd.s32 %s338, %s336
        %s340 = smul.addr %s339, 8
        %s341 = scalar_lea.vmem %s3, %s340
        %p342 = scmp.eq.s32.totalorder %s34, 0
        // Predicated region
        $region45: #{tpu_custom_call.1} parent=43 // pred_check
          %p343 = pneg %p342
        $region46: #{tpu_custom_call.1} parent=43 // pred_check_branch
          %345 = sbr.rel (%p343) target = $region48
        $region47: #{tpu_custom_call.1} parent=43 // pred_region
          %v346 = vld [vmem:[%s327] sm:$0xff]
          %v347 = vld [vmem:[%s4] sm:$0xff]
          %v348 = vld [vmem:[%s4 + $0x8] sm:$0xff]
          %vm349 = vcmask 130048
          %v351 = vsel %vm349, %v346, 0
          %353 = vmatprep.subr.mxu0 0.0
          %354 = vmatpush1.msra.mxu0 0.0
          %355 = vmatprep.subr.mxu0 0.0
          %356 = vmatpush1.msra.mxu0 0.0
          %357 = vmatprep.subr.mxu0 0.0
          %358 = vmatpush1.msra.mxu0 0.0
          %359 = vmatprep.subr.mxu0 0.0
          %360 = vmatpush1.msra.mxu0 0.0
          %361 = vmatprep.subr.mxu0 0.0
          %362 = vmatpush1.msra.mxu0 0.0
          %363 = vmatprep.subr.mxu0 0.0
          %364 = vmatpush1.msra.mxu0 0.0
          %365 = vmatprep.subr.mxu0 0.0
          %366 = vmatpush1.msra.mxu0 0.0
          %367 = vmatprep.subr.mxu0 0.0
          %368 = vmatpush1.msra.mxu0 0.0
          %369 = vmatprep.subr.mxu0 0.0
          %370 = vmatpush1.msra.mxu0 0.0
          %371 = vmatprep.subr.mxu0 0.0
          %372 = vmatpush1.msra.mxu0 0.0
          %373 = vmatprep.subr.mxu0 0.0
          %374 = vmatpush1.msra.mxu0 0.0
          %375 = vmatprep.subr.mxu0 0.0
          %376 = vmatpush1.msra.mxu0 0.0
          %377 = vmatprep.subr.mxu0 0.0
          %378 = vmatpush1.msra.mxu0 0.0
          %379 = vmatprep.subr.mxu0 0.0
          %380 = vmatpush1.msra.mxu0 0.0
          %381 = vmatprep.subr.mxu0 0.0
          %382 = vmatpush1.msra.mxu0 %v348
          %383 = vmatprep.subr.mxu0 0.0
          %384 = vmatpush1.msra.mxu0 %v347
          %385 = vmatprep.subr.mxu0 0.0
          %386 = vmatpush2.msra.mxu0 0.0
          %387 = vmatprep.subr.mxu0 0.0
          %388 = vmatpush2.msra.mxu0 0.0
          %389 = vmatprep.subr.mxu0 0.0
          %390 = vmatpush2.msra.mxu0 0.0
          %391 = vmatprep.subr.mxu0 0.0
          %392 = vmatpush2.msra.mxu0 0.0
          %393 = vmatprep.subr.mxu0 0.0
          %394 = vmatpush2.msra.mxu0 0.0
          %395 = vmatprep.subr.mxu0 0.0
          %396 = vmatpush2.msra.mxu0 0.0
          %397 = vmatprep.subr.mxu0 0.0
          %398 = vmatpush2.msra.mxu0 0.0
          %399 = vmatprep.subr.mxu0 0.0
          %400 = vmatpush2.msra.mxu0 0.0
          %401 = vmatprep.subr.mxu0 0.0
          %402 = vmatpush2.msra.mxu0 0.0
          %403 = vmatprep.subr.mxu0 0.0
          %404 = vmatpush2.msra.mxu0 0.0
          %405 = vmatprep.subr.mxu0 0.0
          %406 = vmatpush2.msra.mxu0 0.0
          %407 = vmatprep.subr.mxu0 0.0
          %408 = vmatpush2.msra.mxu0 0.0
          %409 = vmatprep.subr.mxu0 0.0
          %410 = vmatpush2.msra.mxu0 0.0
          %411 = vmatprep.subr.mxu0 0.0
          %412 = vmatpush2.msra.mxu0 0.0
          %413 = vmatprep.subr.mxu0 0.0
          %414 = vmatpush2.msra.mxu0 0.0
          %415 = vmatprep.subr.mxu0 0.0
          %416 = vmatpush2.msra.mxu0 0.0
          %417 = vmatprep.mubr.f32.mxu0 0.0
          %418 = vmatmul.mubr.f32.gmra.mxu0 %v351
          %v419 = vpop.f32.mrf.mxu0
          %v420 = vadd.f32 0.0, %v419
          %v421 = vpop.f32.mrf.mxu0
          %422 = vdwg.mxu0
          %vm423 = vcmask 261120
          %424 = vst.msk [vmem:[#allocation2] sm:$0xff] %vm423, %v420
          %vm425 = vcmask 7168
          %426 = vst.msk [vmem:[#allocation3] sm:$0xff] %vm425, -inf
          %427 = vst.msk [vmem:[#allocation4] sm:$0xff] %vm425, 0.0
          %428 = vst.msk [vmem:[#allocation5] sm:$0xff] %vm349, 0.0
        $region48: #{tpu_custom_call.1} parent=43 // pred_fallthru
          _
        %v429 = vld [vmem:[%s5] sm:$0xff]
        %v430 = vld [vmem:[%s5 + $0x8] sm:$0xff]
        %v431 = vld [vmem:[%s5 + $0x10] sm:$0xff]
        %v432 = vld [vmem:[%s5 + $0x18] sm:$0xff]
        %v433 = vld [vmem:[%s6] sm:$0xff]
        %v434 = vld [vmem:[%s6 + $0x8] sm:$0xff]
        %v435 = vld [vmem:[%s6 + $0x10] sm:$0xff]
        %v436 = vld [vmem:[%s6 + $0x18] sm:$0xff]
        %s437 = smul.u32 %s34, 8
        %v438 = vlaneseq
        %v439 = vand.u32 %v438, 127
        %v440 = vstv %s437
        %v441 = vadd.s32 %v440, %v439
        %v442 = vld [vmem:[%s334] sm:$0xff]
        %vm443 = vcmask 130048
        %v445 = vsel %vm443, %v429, 0
        %v448 = vsel %vm443, %v430, 0
        %v451 = vsel %vm443, %v431, 0
        %v454 = vsel %vm443, %v432, 0
        %v457 = vsel %vm443, %v442, 0
        %459 = vmatprep.subr.mxu0 0.0
        %460 = vmatpush1.xpose.msra.mxu0 0.0
        %461 = vmatprep.subr.mxu0 0.0
        %462 = vmatpush1.xpose.msra.mxu0 0.0
        %463 = vmatprep.subr.mxu0 0.0
        %464 = vmatpush1.xpose.msra.mxu0 0.0
        %465 = vmatprep.subr.mxu0 0.0
        %466 = vmatpush1.xpose.msra.mxu0 0.0
        %467 = vmatprep.subr.mxu0 0.0
        %468 = vmatpush1.xpose.msra.mxu0 0.0
        %469 = vmatprep.subr.mxu0 0.0
        %470 = vmatpush1.xpose.msra.mxu0 0.0
        %471 = vmatprep.subr.mxu0 0.0
        %472 = vmatpush1.xpose.msra.mxu0 0.0
        %473 = vmatprep.subr.mxu0 0.0
        %474 = vmatpush1.xpose.msra.mxu0 0.0
        %475 = vmatprep.subr.mxu0 0.0
        %476 = vmatpush1.xpose.msra.mxu0 0.0
        %477 = vmatprep.subr.mxu0 0.0
        %478 = vmatpush1.xpose.msra.mxu0 0.0
        %479 = vmatprep.subr.mxu0 0.0
        %480 = vmatpush1.xpose.msra.mxu0 0.0
        %481 = vmatprep.subr.mxu0 0.0
        %482 = vmatpush1.xpose.msra.mxu0 0.0
        %483 = vmatprep.subr.mxu0 0.0
        %484 = vmatpush1.xpose.msra.mxu0 0.0
        %485 = vmatprep.subr.mxu0 0.0
        %486 = vmatpush1.xpose.msra.mxu0 0.0
        %487 = vmatprep.subr.mxu0 0.0
        %488 = vmatpush1.xpose.msra.mxu0 0.0
        %489 = vmatprep.subr.mxu0 0.0
        %490 = vmatpush1.xpose.msra.mxu0 %v457
        %491 = vmatprep.subr.mxu0 0.0
        %492 = vmatpush2.xpose.msra.mxu0 0.0
        %493 = vmatprep.subr.mxu0 0.0
        %494 = vmatpush2.xpose.msra.mxu0 0.0
        %495 = vmatprep.subr.mxu0 0.0
        %496 = vmatpush2.xpose.msra.mxu0 0.0
        %497 = vmatprep.subr.mxu0 0.0
        %498 = vmatpush2.xpose.msra.mxu0 0.0
        %499 = vmatprep.subr.mxu0 0.0
        %500 = vmatpush2.xpose.msra.mxu0 0.0
        %501 = vmatprep.subr.mxu0 0.0
        %502 = vmatpush2.xpose.msra.mxu0 0.0
        %503 = vmatprep.subr.mxu0 0.0
        %504 = vmatpush2.xpose.msra.mxu0 0.0
        %505 = vmatprep.subr.mxu0 0.0
        %506 = vmatpush2.xpose.msra.mxu0 0.0
        %507 = vmatprep.subr.mxu0 0.0
        %508 = vmatpush2.xpose.msra.mxu0 0.0
        %509 = vmatprep.subr.mxu0 0.0
        %510 = vmatpush2.xpose.msra.mxu0 0.0
        %511 = vmatprep.subr.mxu0 0.0
        %512 = vmatpush2.xpose.msra.mxu0 0.0
        %513 = vmatprep.subr.mxu0 0.0
        %514 = vmatpush2.xpose.msra.mxu0 0.0
        %515 = vmatprep.subr.mxu0 0.0
        %516 = vmatpush2.xpose.msra.mxu0 0.0
        %517 = vmatprep.subr.mxu0 0.0
        %518 = vmatpush2.xpose.msra.mxu0 0.0
        %519 = vmatprep.subr.mxu0 0.0
        %520 = vmatpush2.xpose.msra.mxu0 0.0
        %521 = vmatprep.subr.mxu0 0.0
        %522 = vmatpush2.xpose.msra.mxu0 0.0
        %523 = vmatprep.mubr.f32.mxu0 0.0
        %524 = vmatmul.mubr.f32.gmra.mxu0 %v445
        %v525 = vpop.f32.mrf.mxu0
        %v526 = vadd.f32 0.0, %v525
        %v527 = vpop.f32.mrf.mxu0
        %528 = vmatprep.mubr.f32.mxu0 0.0
        %529 = vmatmul.mubr.f32.gmra.mxu0 %v448
        %v530 = vpop.f32.mrf.mxu0
        %v531 = vadd.f32 0.0, %v530
        %v532 = vpop.f32.mrf.mxu0
        %533 = vmatprep.mubr.f32.mxu0 0.0
        %534 = vmatmul.mubr.f32.gmra.mxu0 %v451
        %v535 = vpop.f32.mrf.mxu0
        %v536 = vadd.f32 0.0, %v535
        %v537 = vpop.f32.mrf.mxu0
        %538 = vmatprep.mubr.f32.mxu0 0.0
        %539 = vmatmul.mubr.f32.gmra.mxu0 %v454
        %v540 = vpop.f32.mrf.mxu0
        %v541 = vadd.f32 0.0, %v540
        %v542 = vpop.f32.mrf.mxu0
        %543 = vdwg.mxu0
        %v544 = vld [vmem:[#allocation2] sm:$0xff]
        %v545 = vlaneseq
        %v546 = vshrl.u32 %v545, 7
        %v547 = vsub.s32 0, %v546
        %v548 = vrot.slane %v544, %v547
        %550 = vbcast.lane.b32.xlu0 %v548, 256
        %v551 = vpop.permute.xlu0 %550
        %s553 = sor.u32 256, 8
        %554 = vbcast.lane.b32.xlu0 %v548, %s553
        %v555 = vpop.permute.xlu0 %554
        %s557 = sor.u32 256, 16
        %558 = vbcast.lane.b32.xlu0 %v548, %s557
        %v559 = vpop.permute.xlu0 %558
        %s561 = sor.u32 256, 24
        %562 = vbcast.lane.b32.xlu0 %v548, %s561
        %v563 = vpop.permute.xlu0 %562
        %v564 = vlaneseq
        %v565 = vshrl.u32 %v564, 7
        %v566 = vsub.s32 1, %v565
        %v567 = vrot.slane %v544, %v566
        %569 = vbcast.lane.b32.xlu0 %v567, 256
        %v570 = vpop.permute.xlu0 %569
        %s572 = sor.u32 256, 8
        %573 = vbcast.lane.b32.xlu0 %v567, %s572
        %v574 = vpop.permute.xlu0 %573
        %s576 = sor.u32 256, 16
        %577 = vbcast.lane.b32.xlu0 %v567, %s576
        %v578 = vpop.permute.xlu0 %577
        %s580 = sor.u32 256, 24
        %581 = vbcast.lane.b32.xlu0 %v567, %s580
        %v582 = vpop.permute.xlu0 %581
        %v583 = vlaneseq
        %v584 = vshrl.u32 %v583, 7
        %v585 = vsub.s32 2, %v584
        %v586 = vrot.slane %v544, %v585
        %588 = vbcast.lane.b32.xlu0 %v586, 256
        %v589 = vpop.permute.xlu0 %588
        %s591 = sor.u32 256, 8
        %592 = vbcast.lane.b32.xlu0 %v586, %s591
        %v593 = vpop.permute.xlu0 %592
        %s595 = sor.u32 256, 16
        %596 = vbcast.lane.b32.xlu0 %v586, %s595
        %v597 = vpop.permute.xlu0 %596
        %s599 = sor.u32 256, 24
        %600 = vbcast.lane.b32.xlu0 %v586, %s599
        %v601 = vpop.permute.xlu0 %600
        %v602 = vlaneseq
        %v603 = vshrl.u32 %v602, 7
        %v604 = vsub.s32 3, %v603
        %v605 = vrot.slane %v544, %v604
        %607 = vbcast.lane.b32.xlu0 %v605, 256
        %v608 = vpop.permute.xlu0 %607
        %s610 = sor.u32 256, 8
        %611 = vbcast.lane.b32.xlu0 %v605, %s610
        %v612 = vpop.permute.xlu0 %611
        %s614 = sor.u32 256, 16
        %615 = vbcast.lane.b32.xlu0 %v605, %s614
        %v616 = vpop.permute.xlu0 %615
        %s618 = sor.u32 256, 24
        %619 = vbcast.lane.b32.xlu0 %v605, %s618
        %v620 = vpop.permute.xlu0 %619
        %v621 = vlaneseq
        %v622 = vshrl.u32 %v621, 7
        %v623 = vsub.s32 4, %v622
        %v624 = vrot.slane %v544, %v623
        %626 = vbcast.lane.b32.xlu0 %v624, 256
        %v627 = vpop.permute.xlu0 %626
        %s629 = sor.u32 256, 8
        %630 = vbcast.lane.b32.xlu0 %v624, %s629
        %v631 = vpop.permute.xlu0 %630
        %s633 = sor.u32 256, 16
        %634 = vbcast.lane.b32.xlu0 %v624, %s633
        %v635 = vpop.permute.xlu0 %634
        %s637 = sor.u32 256, 24
        %638 = vbcast.lane.b32.xlu0 %v624, %s637
        %v639 = vpop.permute.xlu0 %638
        %v640 = vlaneseq
        %v641 = vshrl.u32 %v640, 7
        %v642 = vsub.s32 5, %v641
        %v643 = vrot.slane %v544, %v642
        %645 = vbcast.lane.b32.xlu0 %v643, 256
        %v646 = vpop.permute.xlu0 %645
        %s648 = sor.u32 256, 8
        %649 = vbcast.lane.b32.xlu0 %v643, %s648
        %v650 = vpop.permute.xlu0 %649
        %s652 = sor.u32 256, 16
        %653 = vbcast.lane.b32.xlu0 %v643, %s652
        %v654 = vpop.permute.xlu0 %653
        %s656 = sor.u32 256, 24
        %657 = vbcast.lane.b32.xlu0 %v643, %s656
        %v658 = vpop.permute.xlu0 %657
        %v659 = vlaneseq
        %v660 = vshrl.u32 %v659, 7
        %v661 = vsub.s32 6, %v660
        %v662 = vrot.slane %v544, %v661
        %664 = vbcast.lane.b32.xlu0 %v662, 256
        %v665 = vpop.permute.xlu0 %664
        %s667 = sor.u32 256, 8
        %668 = vbcast.lane.b32.xlu0 %v662, %s667
        %v669 = vpop.permute.xlu0 %668
        %s671 = sor.u32 256, 16
        %672 = vbcast.lane.b32.xlu0 %v662, %s671
        %v673 = vpop.permute.xlu0 %672
        %s675 = sor.u32 256, 24
        %676 = vbcast.lane.b32.xlu0 %v662, %s675
        %v677 = vpop.permute.xlu0 %676
        %v678 = vlaneseq
        %v679 = vshrl.u32 %v678, 7
        %v680 = vsub.s32 7, %v679
        %v681 = vrot.slane %v544, %v680
        %683 = vbcast.lane.b32.xlu0 %v681, 256
        %v684 = vpop.permute.xlu0 %683
        %s686 = sor.u32 256, 8
        %687 = vbcast.lane.b32.xlu0 %v681, %s686
        %v688 = vpop.permute.xlu0 %687
        %s690 = sor.u32 256, 16
        %691 = vbcast.lane.b32.xlu0 %v681, %s690
        %v692 = vpop.permute.xlu0 %691
        %s694 = sor.u32 256, 24
        %695 = vbcast.lane.b32.xlu0 %v681, %s694
        %v696 = vpop.permute.xlu0 %695
        %v697 = vadd.f32 %v551, %v526
        %v698 = vadd.f32 %v555, %v531
        %v699 = vadd.f32 %v559, %v536
        %v700 = vadd.f32 %v563, %v541
        %v701 = vadd.f32 %v570, %v526
        %v702 = vadd.f32 %v574, %v531
        %v703 = vadd.f32 %v578, %v536
        %v704 = vadd.f32 %v582, %v541
        %v705 = vadd.f32 %v589, %v526
        %v706 = vadd.f32 %v593, %v531
        %v707 = vadd.f32 %v597, %v536
        %v708 = vadd.f32 %v601, %v541
        %v709 = vadd.f32 %v608, %v526
        %v710 = vadd.f32 %v612, %v531
        %v711 = vadd.f32 %v616, %v536
        %v712 = vadd.f32 %v620, %v541
        %v713 = vadd.f32 %v627, %v526
        %v714 = vadd.f32 %v631, %v531
        %v715 = vadd.f32 %v635, %v536
        %v716 = vadd.f32 %v639, %v541
        %v717 = vadd.f32 %v646, %v526
        %v718 = vadd.f32 %v650, %v531
        %v719 = vadd.f32 %v654, %v536
        %v720 = vadd.f32 %v658, %v541
        %v721 = vadd.f32 %v665, %v526
        %v722 = vadd.f32 %v669, %v531
        %v723 = vadd.f32 %v673, %v536
        %v724 = vadd.f32 %v677, %v541
        %v725 = vadd.f32 %v684, %v526
        %v726 = vadd.f32 %v688, %v531
        %v727 = vadd.f32 %v692, %v536
        %v728 = vadd.f32 %v696, %v541
        %v729 = vtanh.pop %v697
        %v730 = vtanh.pop %v698
        %v731 = vtanh.pop %v699
        %v732 = vtanh.pop %v700
        %v733 = vtanh.pop %v701
        %v734 = vtanh.pop %v702
        %v735 = vtanh.pop %v703
        %v736 = vtanh.pop %v704
        %v737 = vtanh.pop %v705
        %v738 = vtanh.pop %v706
        %v739 = vtanh.pop %v707
        %v740 = vtanh.pop %v708
        %v741 = vtanh.pop %v709
        %v742 = vtanh.pop %v710
        %v743 = vtanh.pop %v711
        %v744 = vtanh.pop %v712
        %v745 = vtanh.pop %v713
        %v746 = vtanh.pop %v714
        %v747 = vtanh.pop %v715
        %v748 = vtanh.pop %v716
        %v749 = vtanh.pop %v717
        %v750 = vtanh.pop %v718
        %v751 = vtanh.pop %v719
        %v752 = vtanh.pop %v720
        %v753 = vtanh.pop %v721
        %v754 = vtanh.pop %v722
        %v755 = vtanh.pop %v723
        %v756 = vtanh.pop %v724
        %v757 = vtanh.pop %v725
        %v758 = vtanh.pop %v726
        %v759 = vtanh.pop %v727
        %v760 = vtanh.pop %v728
        %762 = vset.pattern.permute.xlu0 0
        %763 = vperm.xlu0 %762, %v433
        %v764 = vpop.permute.xlu0 %763
        %767 = vset.pattern.permute.xlu0 0
        %768 = vperm.xlu0 %767, %v434
        %v769 = vpop.permute.xlu0 %768
        %772 = vset.pattern.permute.xlu0 0
        %773 = vperm.xlu0 %772, %v435
        %v774 = vpop.permute.xlu0 %773
        %777 = vset.pattern.permute.xlu0 0
        %778 = vperm.xlu0 %777, %v436
        %v779 = vpop.permute.xlu0 %778
        %v781 = vmul.f32 %v729, %v764
        %v782 = vmul.f32 %v730, %v769
        %v783 = vmul.f32 %v731, %v774
        %v784 = vmul.f32 %v732, %v779
        %v785 = vmul.f32 %v733, %v764
        %v786 = vmul.f32 %v734, %v769
        %v787 = vmul.f32 %v735, %v774
        %v788 = vmul.f32 %v736, %v779
        %v789 = vmul.f32 %v737, %v764
        %v790 = vmul.f32 %v738, %v769
        %v791 = vmul.f32 %v739, %v774
        %v792 = vmul.f32 %v740, %v779
        %v793 = vmul.f32 %v741, %v764
        %v794 = vmul.f32 %v742, %v769
        %v795 = vmul.f32 %v743, %v774
        %v796 = vmul.f32 %v744, %v779
        %v797 = vmul.f32 %v745, %v764
        %v798 = vmul.f32 %v746, %v769
        %v799 = vmul.f32 %v747, %v774
        %v800 = vmul.f32 %v748, %v779
        %v801 = vmul.f32 %v749, %v764
        %v802 = vmul.f32 %v750, %v769
        %v803 = vmul.f32 %v751, %v774
        %v804 = vmul.f32 %v752, %v779
        %v805 = vmul.f32 %v753, %v764
        %v806 = vmul.f32 %v754, %v769
        %v807 = vmul.f32 %v755, %v774
        %v808 = vmul.f32 %v756, %v779
        %v809 = vmul.f32 %v757, %v764
        %v810 = vmul.f32 %v758, %v769
        %v811 = vmul.f32 %v759, %v774
        %v812 = vmul.f32 %v760, %v779
        %vm813 = vcmask 64512
        %v814 = vsel %vm813, %v781, 0.0
        %v815 = vsel %vm813, %v782, 0.0
        %v816 = vadd.f32 %v814, %v815
        %v817 = vsel %vm813, %v783, 0.0
        %v818 = vadd.f32 %v816, %v817
        %v819 = vsel %vm813, %v784, 0.0
        %v820 = vadd.f32 %v818, %v819
        %v821 = vrot.slane %v820, 4
        %v822 = vadd.f32 %v820, %v821
        %v823 = vrot.slane %v822, 2
        %v824 = vadd.f32 %v822, %v823
        %v825 = vrot.slane %v824, 1
        %v826 = vadd.f32 %v824, %v825
        %v827 = vsel %vm813, %v785, 0.0
        %v828 = vsel %vm813, %v786, 0.0
        %v829 = vadd.f32 %v827, %v828
        %v830 = vsel %vm813, %v787, 0.0
        %v831 = vadd.f32 %v829, %v830
        %v832 = vsel %vm813, %v788, 0.0
        %v833 = vadd.f32 %v831, %v832
        %v834 = vrot.slane %v833, 4
        %v835 = vadd.f32 %v833, %v834
        %v836 = vrot.slane %v835, 2
        %v837 = vadd.f32 %v835, %v836
        %v838 = vrot.slane %v837, 1
        %v839 = vadd.f32 %v837, %v838
        %v840 = vsel %vm813, %v789, 0.0
        %v841 = vsel %vm813, %v790, 0.0
        %v842 = vadd.f32 %v840, %v841
        %v843 = vsel %vm813, %v791, 0.0
        %v844 = vadd.f32 %v842, %v843
        %v845 = vsel %vm813, %v792, 0.0
        %v846 = vadd.f32 %v844, %v845
        %v847 = vrot.slane %v846, 4
        %v848 = vadd.f32 %v846, %v847
        %v849 = vrot.slane %v848, 2
        %v850 = vadd.f32 %v848, %v849
        %v851 = vrot.slane %v850, 1
        %v852 = vadd.f32 %v850, %v851
        %v853 = vsel %vm813, %v793, 0.0
        %v854 = vsel %vm813, %v794, 0.0
        %v855 = vadd.f32 %v853, %v854
        %v856 = vsel %vm813, %v795, 0.0
        %v857 = vadd.f32 %v855, %v856
        %v858 = vsel %vm813, %v796, 0.0
        %v859 = vadd.f32 %v857, %v858
        %v860 = vrot.slane %v859, 4
        %v861 = vadd.f32 %v859, %v860
        %v862 = vrot.slane %v861, 2
        %v863 = vadd.f32 %v861, %v862
        %v864 = vrot.slane %v863, 1
        %v865 = vadd.f32 %v863, %v864
        %v866 = vsel %vm813, %v797, 0.0
        %v867 = vsel %vm813, %v798, 0.0
        %v868 = vadd.f32 %v866, %v867
        %v869 = vsel %vm813, %v799, 0.0
        %v870 = vadd.f32 %v868, %v869
        %v871 = vsel %vm813, %v800, 0.0
        %v872 = vadd.f32 %v870, %v871
        %v873 = vrot.slane %v872, 4
        %v874 = vadd.f32 %v872, %v873
        %v875 = vrot.slane %v874, 2
        %v876 = vadd.f32 %v874, %v875
        %v877 = vrot.slane %v876, 1
        %v878 = vadd.f32 %v876, %v877
        %v879 = vsel %vm813, %v801, 0.0
        %v880 = vsel %vm813, %v802, 0.0
        %v881 = vadd.f32 %v879, %v880
        %v882 = vsel %vm813, %v803, 0.0
        %v883 = vadd.f32 %v881, %v882
        %v884 = vsel %vm813, %v804, 0.0
        %v885 = vadd.f32 %v883, %v884
        %v886 = vrot.slane %v885, 4
        %v887 = vadd.f32 %v885, %v886
        %v888 = vrot.slane %v887, 2
        %v889 = vadd.f32 %v887, %v888
        %v890 = vrot.slane %v889, 1
        %v891 = vadd.f32 %v889, %v890
        %v892 = vsel %vm813, %v805, 0.0
        %v893 = vsel %vm813, %v806, 0.0
        %v894 = vadd.f32 %v892, %v893
        %v895 = vsel %vm813, %v807, 0.0
        %v896 = vadd.f32 %v894, %v895
        %v897 = vsel %vm813, %v808, 0.0
        %v898 = vadd.f32 %v896, %v897
        %v899 = vrot.slane %v898, 4
        %v900 = vadd.f32 %v898, %v899
        %v901 = vrot.slane %v900, 2
        %v902 = vadd.f32 %v900, %v901
        %v903 = vrot.slane %v902, 1
        %v904 = vadd.f32 %v902, %v903
        %v905 = vsel %vm813, %v809, 0.0
        %v906 = vsel %vm813, %v810, 0.0
        %v907 = vadd.f32 %v905, %v906
        %v908 = vsel %vm813, %v811, 0.0
        %v909 = vadd.f32 %v907, %v908
        %v910 = vsel %vm813, %v812, 0.0
        %v911 = vadd.f32 %v909, %v910
        %v912 = vrot.slane %v911, 4
        %v913 = vadd.f32 %v911, %v912
        %v914 = vrot.slane %v913, 2
        %v915 = vadd.f32 %v913, %v914
        %v916 = vrot.slane %v915, 1
        %v917 = vadd.f32 %v915, %v916
        %s918 = sld [smem:[#allocation7 + %s32]]
        %v919 = vstv %s918
        %vm920 = vcmp.lt.s32.totalorder %v441, %v919
        %vm929 = vcmask 1041409
        %v930 = vsel %vm929, %v839, %v826
        %vm931 = vcmask 1042434
        %v932 = vsel %vm931, %v852, %v930
        %vm933 = vcmask 1043459
        %v934 = vsel %vm933, %v865, %v932
        %vm935 = vcmask 1044484
        %v936 = vsel %vm935, %v878, %v934
        %vm937 = vcmask 1045509
        %v938 = vsel %vm937, %v891, %v936
        %vm939 = vcmask 1046534
        %v940 = vsel %vm939, %v904, %v938
        %vm941 = vcmask 1047559
        %v942 = vsel %vm941, %v917, %v940
        %v944 = vsel %vm920, %v942, -1000000.0
        %v945 = vld [vmem:[#allocation3] sm:$0xff]
        %v946 = vsel %vm813, %v944, -inf
        %947 = vmax.xlane.f32.xlu0 %v946
        %v948 = vpop.xlane.xlu0 %947
        %v949 = vmax.f32 %v945, %v948
        %v950 = vsub.f32 %v945, %v949
        %v951 = vmul.f32 %v950, 1.442695
        %v952 = vpow.pop %v951
        %954 = vset.pattern.permute.xlu0 0
        %955 = vperm.xlu0 %954, %v949
        %v956 = vpop.permute.xlu0 %955
        %v958 = vsub.f32 %v944, %v956
        %v959 = vmul.f32 %v958, 1.442695
        %v960 = vpow.pop %v959
        %v961 = vld [vmem:[#allocation4] sm:$0xff]
        %v962 = vmul.f32 %v952, %v961
        %v963 = vsel %vm813, %v960, 0.0
        %964 = vadd.xlane.f32.xlu0 %v963
        %v965 = vpop.xlane.xlu0 %964
        %v966 = vadd.f32 %v962, %v965
        %vm967 = vcmask 7168
        %968 = vst.msk [vmem:[#allocation4] sm:$0xff] %vm967, %v966
        %v969 = vld [vmem:[#allocation5] sm:$0xff]
        %971 = vset.pattern.permute.xlu0 0
        %972 = vperm.xlu0 %971, %v952
        %v973 = vpop.permute.xlu0 %972
        %v975 = vmul.f32 %v973, %v969
        %v976 = vld [vmem:[%s341] sm:$0xff]
        %v978 = vsel %vm813, %v960, 0
        %980 = vmatprep.subr.mxu0 0.0
        %981 = vmatpush1.msra.mxu0 0.0
        %982 = vmatprep.subr.mxu0 0.0
        %983 = vmatpush1.msra.mxu0 0.0
        %984 = vmatprep.subr.mxu0 0.0
        %985 = vmatpush1.msra.mxu0 0.0
        %986 = vmatprep.subr.mxu0 0.0
        %987 = vmatpush1.msra.mxu0 0.0
        %988 = vmatprep.subr.mxu0 0.0
        %989 = vmatpush1.msra.mxu0 0.0
        %990 = vmatprep.subr.mxu0 0.0
        %991 = vmatpush1.msra.mxu0 0.0
        %992 = vmatprep.subr.mxu0 0.0
        %993 = vmatpush1.msra.mxu0 0.0
        %994 = vmatprep.subr.mxu0 0.0
        %995 = vmatpush1.msra.mxu0 0.0
        %996 = vmatprep.subr.mxu0 0.0
        %997 = vmatpush1.msra.mxu0 0.0
        %998 = vmatprep.subr.mxu0 0.0
        %999 = vmatpush1.msra.mxu0 0.0
        %1000 = vmatprep.subr.mxu0 0.0
        %1001 = vmatpush1.msra.mxu0 0.0
        %1002 = vmatprep.subr.mxu0 0.0
        %1003 = vmatpush1.msra.mxu0 0.0
        %1004 = vmatprep.subr.mxu0 0.0
        %1005 = vmatpush1.msra.mxu0 0.0
        %1006 = vmatprep.subr.mxu0 0.0
        %1007 = vmatpush1.msra.mxu0 0.0
        %1008 = vmatprep.subr.mxu0 0.0
        %1009 = vmatpush1.msra.mxu0 0.0
        %1010 = vmatprep.subr.mxu0 0.0
        %1011 = vmatpush1.msra.mxu0 %v976
        %1012 = vmatprep.subr.mxu0 0.0
        %1013 = vmatpush2.msra.mxu0 0.0
        %1014 = vmatprep.subr.mxu0 0.0
        %1015 = vmatpush2.msra.mxu0 0.0
        %1016 = vmatprep.subr.mxu0 0.0
        %1017 = vmatpush2.msra.mxu0 0.0
        %1018 = vmatprep.subr.mxu0 0.0
        %1019 = vmatpush2.msra.mxu0 0.0
        %1020 = vmatprep.subr.mxu0 0.0
        %1021 = vmatpush2.msra.mxu0 0.0
        %1022 = vmatprep.subr.mxu0 0.0
        %1023 = vmatpush2.msra.mxu0 0.0
        %1024 = vmatprep.subr.mxu0 0.0
        %1025 = vmatpush2.msra.mxu0 0.0
        %1026 = vmatprep.subr.mxu0 0.0
        %1027 = vmatpush2.msra.mxu0 0.0
        %1028 = vmatprep.subr.mxu0 0.0
        %1029 = vmatpush2.msra.mxu0 0.0
        %1030 = vmatprep.subr.mxu0 0.0
        %1031 = vmatpush2.msra.mxu0 0.0
        %1032 = vmatprep.subr.mxu0 0.0
        %1033 = vmatpush2.msra.mxu0 0.0
        %1034 = vmatprep.subr.mxu0 0.0
        %1035 = vmatpush2.msra.mxu0 0.0
        %1036 = vmatprep.subr.mxu0 0.0
        %1037 = vmatpush2.msra.mxu0 0.0
        %1038 = vmatprep.subr.mxu0 0.0
        %1039 = vmatpush2.msra.mxu0 0.0
        %1040 = vmatprep.subr.mxu0 0.0
        %1041 = vmatpush2.msra.mxu0 0.0
        %1042 = vmatprep.subr.mxu0 0.0
        %1043 = vmatpush2.msra.mxu0 0.0
        %1044 = vmatprep.mubr.f32.mxu0 0.0
        %1045 = vmatmul.mubr.f32.gmra.mxu0 %v978
        %v1046 = vpop.f32.mrf.mxu0
        %v1047 = vadd.f32 0.0, %v1046
        %v1048 = vpop.f32.mrf.mxu0
        %1049 = vdwg.mxu0
        %v1050 = vadd.f32 %v975, %v1047
        %1051 = vst.msk [vmem:[#allocation5] sm:$0xff] %vm443, %v1050
        %1052 = vst.msk [vmem:[#allocation3] sm:$0xff] %vm967, %v949
        // Predicated region
        $region49: #{tpu_custom_call.1} parent=43 // pred_check
          %p1053 = pneg %p342
        $region50: #{tpu_custom_call.1} parent=43 // pred_check_branch
          %1055 = sbr.rel (%p1053) target = $region52
        $region51: #{tpu_custom_call.1} parent=43 // pred_region
          %v1056 = vld [vmem:[#allocation4] sm:$0xff]
          %v1057 = vrcp.pop %v1056
          %v1058 = vld [vmem:[#allocation5] sm:$0xff]
          %1060 = vset.pattern.permute.xlu0 0
          %1061 = vperm.xlu0 %1060, %v1057
          %v1062 = vpop.permute.xlu0 %1061
          %v1064 = vmul.f32 %v1058, %v1062
          %1065 = vst.msk [vmem:[%s320] sm:$0xff] %vm443, %v1064
        $region52: #{tpu_custom_call.1} parent=43 // pred_fallthru
          _
        %s1066 = sand.u32 %s203, 1
        %s1067 = scalar_lea.sflag [#allocation9], %s1066
        %s1068 = sand.u32 %s203, 1
        %s1069 = smul.addr %s1068, 8
        %s1070 = scalar_lea.vmem [#allocation8], %s1069
        // Predicated region
        $region53: #{tpu_custom_call.1} parent=43 // pred_check
          %p1071 = pneg %p213
        $region54: #{tpu_custom_call.1} parent=43 // pred_check_branch
          %1073 = sbr.rel (%p1071) target = $region56
        $region55: #{tpu_custom_call.1} parent=43 // pred_region
          %s1075 = ssub.s32 128, 128
          %1076 = vsyncadd %s1067, %s1075
          %s1077 = sadd.s32 %s33, %s32
          %s1078 = smul.addr %s1077, 128
          %s1079 = scalar_lea.hbm %s7, %s1078
          %s1081 = sshll.u32 %s1070, 4
          %s1082 = int_to_ptr.vmem [resolvable:$true] %s1081
          %1084 = dma.vmem_to_hbm [thread:$0]  %s1082, 128, %s1079, %s1067
        $region56: #{tpu_custom_call.1} parent=43 // pred_fallthru
          _
      $region44: #{tpu_custom_call.1} parent=5 // pred_fallthru
        _
      %p1085 = scmp.le.s32.totalorder 2, %s22
      // Predicated region
      $region57: #{tpu_custom_call.1} parent=5 // pred_check
        %p1086 = pneg %p1085
      $region58: #{tpu_custom_call.1} parent=5 // pred_check_branch
        %1088 = sbr.rel (%p1086) target = $region60
      $region59: #{tpu_custom_call.1} parent=5 // pred_region
        %s1089 = ssub.s32 %s22, 2
        // Predicated region
        $region61: #{tpu_custom_call.1} parent=59 // pred_check
          %p1090 = pneg %p219
        $region62: #{tpu_custom_call.1} parent=59 // pred_check_branch
          %1092 = sbr.rel (%p1090) target = $region64
        $region63: #{tpu_custom_call.1} parent=59 // pred_region
          %s1093 = sand.u32 %s204, 1
          %s1094 = scalar_lea.sflag [#allocation9], %s1093
          %s1095 = sand.u32 %s204, 1
          %s1096 = smul.addr %s1095, 8
          %s1097 = scalar_lea.vmem [#allocation8], %s1096
          %1098 = dma.done %s1094, 128
        $region64: #{tpu_custom_call.1} parent=59 // pred_fallthru
          _
      $region60: #{tpu_custom_call.1} parent=5 // pred_fallthru
        _
    $region6: #{tpu_custom_call.1} parent=1 // loop_footer
      %s26 = sadd.s32 1, %s22
    $region7: #{tpu_custom_call.1} parent=1 // loop_footer_branch
      %21 = sbr.rel target = $region3
    $region8: #{tpu_custom_call.1} parent=1 // loop_exit
      _
    %1099 = vsyncpa [#allocation9], 1
    %s1100 = scalar_lea.sflag [#allocation9], 1
    %1101 = vsyncpa %s1100, 1

</llo_original>
